<compile_context>
chip_gen: v6e
topology: v6e:2x2x1
jax: 0.10.0
libtpu: 0.0.40
codegen_flags: <defaults>
</compile_context>

<pallas_src>
import math

import jax
import jax.numpy as jnp
from jax import lax
from jax.experimental import pallas as pl
from jax.experimental.pallas import tpu as pltpu


def _round_up(x, m):
    return ((x + m - 1) // m) * m


def _make_kernel(tk, in_size, x_resident, mask_last_k):
    """Build the fused Linear+PReLU+BatchNorm kernel for one tiling configuration."""

    def kernel(x_ref, w_ref, b_ref, alpha_ref, gamma_ref, beta_ref, o_ref):
        k = pl.program_id(1)

        # o_ref's block index is k-invariant -> the f32 output block stays resident in
        # VMEM across the whole K sweep and doubles as the accumulator (no scratch).
        @pl.when(k == 0)
        def _init():
            o_ref[...] = jnp.zeros_like(o_ref)

        if x_resident:
            # Whole activation is resident; slice this step's K chunk out of VMEM.
            x_blk = x_ref[:, pl.ds(pl.multiple_of(k * tk, 128), tk)]
        else:
            x_blk = x_ref[...]
        w_blk = w_ref[...]

        if mask_last_k:
            # In is not a multiple of tk: the last K tile extends past the array, and
            # the out-of-range part of the VMEM block is unspecified (possibly NaN/Inf).
            # Zero BOTH operands there so garbage cannot contaminate the accumulator.
            valid = in_size - k * tk                     # >= tk on all but the last tile
            x_col = lax.broadcasted_iota(jnp.int32, x_blk.shape, 1)
            w_col = lax.broadcasted_iota(jnp.int32, w_blk.shape, 1)
            x_blk = jnp.where(x_col < valid, x_blk, 0)
            w_blk = jnp.where(w_col < valid, w_blk, 0)

        # (B, tk) . (tn, tk), contracting on the In axis: W keeps its (Out, In) HBM
        # layout -- no wrapper-side transpose or pad copies of the weight.
        # TODO(synk): confirm via pl.lower_as_mlir that Mosaic does not insert a vxpose
        #             of the (tn, tk) weight tile; irrelevant while DMA-bound, but would
        #             matter once weight bytes shrink further (fp8 on v7x).
        o_ref[...] += lax.dot_general(
            x_blk, w_blk,
            dimension_numbers=(((1,), (1,)), ((), ())),
            preferred_element_type=jnp.float32)

        @pl.when(k == pl.num_programs(1) - 1)
        def _finalize():
            y = o_ref[...] + b_ref[...]
            # PReLU with a single shared alpha (scalar path: SMEM).
            alpha = alpha_ref[0]
            y = jnp.where(y >= 0, y, alpha * y)
            # BatchNorm1d, training mode: per-feature mean / biased variance over the
            # batch dim (the whole batch is resident in this block -> exact stats).
            mean = jnp.mean(y, axis=0, keepdims=True)
            var = jnp.mean((y - mean) * (y - mean), axis=0, keepdims=True)
            y = (y - mean) * lax.rsqrt(var + 1e-5)
            o_ref[...] = y * gamma_ref[...] + beta_ref[...]

    return kernel


def _reference(x, w, b, alpha, gamma, beta, eps=1e-5):
    """Plain fused XLA implementation (also serves as the tiny-shape fallback)."""
    y = x @ w.T + b
    y = jnp.where(y >= 0, y, alpha * y)
    mean = y.mean(axis=0, keepdims=True)
    var = ((y - mean) ** 2).mean(axis=0, keepdims=True)
    return (y - mean) * lax.rsqrt(var + eps) * gamma + beta


def standard_linear(x, w, b, alpha, gamma, beta, *, matmul_dtype=jnp.bfloat16):
    """x: (B, In); w: (Out, In); b/gamma/beta: (Out,); alpha: scalar. Returns (B, Out) f32."""
    x = jnp.asarray(x)
    w = jnp.asarray(w)
    b = jnp.asarray(b, jnp.float32)
    alpha = jnp.asarray(alpha, jnp.float32)
    gamma = jnp.asarray(gamma, jnp.float32)
    beta = jnp.asarray(beta, jnp.float32)

    B, In = x.shape
    Out = w.shape[0]

    # Sub-tile layers: pallas_call fixed overhead (+ tile padding) dominates, so use a
    # plain fused XLA computation instead.
    if In < 128 or Out < 128:
        return _reference(x.astype(jnp.float32), w.astype(jnp.float32),
                          b, alpha, gamma, beta)

    # bf16 operands (f32 accumulation) halve weight DMA bytes; bf16 matmul is full-rate
    # on the MXU of all generations.  In real usage W should already live in bf16 so
    # this cast is free / amortized across calls.
    if x.dtype != matmul_dtype:
        x = x.astype(matmul_dtype)
    if w.dtype != matmul_dtype:
        w = w.astype(matmul_dtype)
    itemsize = jnp.dtype(matmul_dtype).itemsize

    # ---- Tile selection ---------------------------------------------------------
    # Lane-dense output tile; keep n_out >= 2 when possible so the "parallel" j axis
    # shards across v7x's two TensorCores.
    tn = 512
    while tn > 128 and _round_up(Out, tn) < 2 * tn:
        tn //= 2
    # K tile sized so each weight block is ~2 MiB (amortizes the ~0.35 us/step grid
    # overhead; ~4 MiB double-buffered, well inside even v7x's 64 MiB VMEM).
    target_w_bytes = 2 << 20
    tk = _round_up(max(128, min(In, target_w_bytes // (tn * itemsize))), 128)
    tk = min(tk, _round_up(In, 128))

    n_out = pl.cdiv(Out, tn)
    n_k = pl.cdiv(In, tk)
    in_cover = n_k * tk                     # K extent covered by the tiling
    mask_last_k = (In % tk) != 0            # last K tile is partial -> mask in kernel

    # Hold x fully resident in VMEM when small (removes the per-output-tile re-DMA of
    # x); otherwise stream (B, tk) blocks.
    x_resident = B * in_cover * itemsize <= (4 << 20)
    if x_resident:
        x_spec = pl.BlockSpec((B, in_cover), lambda j, k: (0, 0))
        x_bytes = B * in_cover * itemsize
    else:
        x_spec = pl.BlockSpec((B, tk), lambda j, k: (0, k))
        x_bytes = 2 * B * tk * itemsize

    # ---- VMEM budget (per-chip, derived from the tile footprint) ------------------
    try:
        vmem_cap = int(pltpu.get_tpu_info().vmem_capacity_bytes)
    except Exception:  # pragma: no cover - conservative default (v7x physical VMEM)
        vmem_cap = 64 << 20
    w_bytes = 2 * tn * tk * itemsize        # double-buffered weight stream
    o_bytes = 2 * B * tn * 4                # f32 output / accumulator block
    misc_bytes = 3 * 2 * tn * 4 + (4 << 20)  # bias/gamma/beta blocks + Mosaic scratch
    vmem_bytes = int(min(max(w_bytes + x_bytes + o_bytes + misc_bytes, 16 << 20),
                         (vmem_cap * 3) // 4))

    grid_spec = pltpu.PrefetchScalarGridSpec(
        num_scalar_prefetch=0,
        grid=(n_out, n_k),
        in_specs=[
            x_spec,                                             # activations
            pl.BlockSpec((tn, tk), lambda j, k: (j, k)),        # W, kept in (Out, In)
            pl.BlockSpec((1, tn), lambda j, k: (0, j)),         # bias
            pl.BlockSpec(memory_space=pltpu.MemorySpace.SMEM),  # PReLU alpha (scalar)
            pl.BlockSpec((1, tn), lambda j, k: (0, j)),         # BN gamma
            pl.BlockSpec((1, tn), lambda j, k: (0, j)),         # BN beta
        ],
        out_specs=pl.BlockSpec((B, tn), lambda j, k: (0, j)),
    )

    out = pl.pallas_call(
        _make_kernel(tk, In, x_resident, mask_last_k),
        out_shape=jax.ShapeDtypeStruct((B, Out), jnp.float32),
        grid_spec=grid_spec,
        compiler_params=pltpu.CompilerParams(
            dimension_semantics=("parallel", "arbitrary"),
            vmem_limit_bytes=vmem_bytes),
    )(x, w, b.reshape(1, Out), alpha.reshape(1),
      gamma.reshape(1, Out), beta.reshape(1, Out))

    return out


if __name__ == "__main__":
    key = jax.random.PRNGKey(0)
    kx1, kw1, kb1, kx2, kw2, kb2 = jax.random.split(key, 6)

    def make_args(kx, kw, kb, batch, in_size, out_size):
        x = jax.random.normal(kx, (batch, in_size), dtype=jnp.float32)
        bound = 1.0 / math.sqrt(in_size)
        w = jax.random.uniform(kw, (out_size, in_size), minval=-bound, maxval=bound,
                               dtype=jnp.float32)
        b = jax.random.uniform(kb, (out_size,), minval=-bound, maxval=bound,
                               dtype=jnp.float32)
        alpha = jnp.float32(0.25)                     # PReLU default init
        gamma = jnp.ones((out_size,), jnp.float32)    # BatchNorm1d weight
        beta = jnp.zeros((out_size,), jnp.float32)    # BatchNorm1d bias
        return x, w, b, alpha, gamma, beta

    # 1) Tile-aligned case: exercises the fused Pallas kernel (grid (2, 1), bf16 MXU,
    #    resident x, no pads anywhere).
    args = make_args(kx1, kw1, kb1, batch=16, in_size=512, out_size=512)
    out = standard_linear(*args)
    jax.block_until_ready(out)
    ref = _reference(*args)
    assert out.shape == (16, 512)
    # bf16 matmul with f32 accumulation -> looser tolerance than a bit-exact f32 check.
    assert jnp.allclose(out, ref, atol=3e-2, rtol=3e-2), \
        float(jnp.max(jnp.abs(out - ref)))

    # 2) Unaligned case: partial last K tile (in-kernel operand mask) + partial Out tile
    #    (masked output store), still with zero HBM-side padding.
    args = make_args(kx2, kw2, kb2, batch=8, in_size=424, out_size=280)
    out = standard_linear(*args)
    jax.block_until_ready(out)
    ref = _reference(*args)
    assert out.shape == (8, 280)
    assert jnp.allclose(out, ref, atol=3e-2, rtol=3e-2), \
        float(jnp.max(jnp.abs(out - ref)))

    # 3) Tiny layer consistent with the module's small sizes -> fused-XLA fallback path.
    args = make_args(kx1, kw2, kb1, batch=8, in_size=32, out_size=32)
    out = standard_linear(*args)
    jax.block_until_ready(out)
    assert out.shape == (8, 32)

    print("KERNEL_OK")
</pallas_src>

<mosaic_0001>
module attributes {stable_mosaic.version = 11 : i64} {
  func.func @kernel(%arg0: i32, %arg1: i32, %arg2: memref<16x512xbf16, #tpu.memory_space<vmem>>, %arg3: memref<256x512xbf16, #tpu.memory_space<vmem>>, %arg4: memref<1x256xf32, #tpu.memory_space<vmem>>, %arg5: memref<1xf32, #tpu.memory_space<smem>>, %arg6: memref<1x256xf32, #tpu.memory_space<vmem>>, %arg7: memref<1x256xf32, #tpu.memory_space<vmem>>, %arg8: memref<16x256xf32, #tpu.memory_space<vmem>>) attributes {dimension_semantics = [#tpu.dimension_semantics<parallel>, #tpu.dimension_semantics<arbitrary>], iteration_bounds = array<i64: 2, 1>, scalar_prefetch = 0 : i64, scratch_operands = 0 : i64, tpu.core_type = #tpu.core_type<tc>, window_params = [{pipeline_mode = #tpu.pipeline_mode<synchronous>, transform_indices = @transform_0, window_bounds = array<i64: 16, 512>}, {transform_indices = @transform_1, window_bounds = array<i64: 256, 512>}, {transform_indices = @transform_2, window_bounds = array<i64: 1, 256>}, {transform_indices = @transform_3, window_bounds = array<i64: 1>}, {transform_indices = @transform_4, window_bounds = array<i64: 1, 256>}, {transform_indices = @transform_5, window_bounds = array<i64: 1, 256>}, {transform_indices = @transform_6, window_bounds = array<i64: 16, 256>}]} {
    %c0_i32 = arith.constant 0 : i32
    %0 = arith.cmpi eq, %arg1, %c0_i32 : i32
    %1 = arith.extui %0 : i1 to i32
    %c0_i32_0 = arith.constant 0 : i32
    %2 = arith.cmpi ne, %1, %c0_i32_0 : i32
    scf.if %2 {
      %cst_9 = arith.constant 0.000000e+00 : f32
      %15 = vector.broadcast %cst_9 : f32 to vector<16x256xf32>
      %c0_10 = arith.constant 0 : index
      %c0_11 = arith.constant 0 : index
      %16 = vector.load %arg8[%c0_10, %c0_11] : memref<16x256xf32, #tpu.memory_space<vmem>>, vector<16x256xf32>
      tpu.vector_store %arg8[%c0_10, %c0_11], %15 {strides = array<i32>} : memref<16x256xf32, #tpu.memory_space<vmem>>, vector<16x256xf32>,
    } else {
    }
    %c512_i32 = arith.constant 512 : i32
    %3 = arith.muli %arg1, %c512_i32 : i32
    %4 = tpu.assume_multiple %3, 128 : i32
    %c0 = arith.constant 0 : index
    %5 = arith.index_cast %4 : i32 to index
    %6 = vector.load %arg2[%c0, %5] : memref<16x512xbf16, #tpu.memory_space<vmem>>, vector<16x512xbf16>
    %c0_1 = arith.constant 0 : index
    %c0_2 = arith.constant 0 : index
    %7 = vector.load %arg3[%c0_1, %c0_2] : memref<256x512xbf16, #tpu.memory_space<vmem>>, vector<256x512xbf16>
    %c0_3 = arith.constant 0 : index
    %c0_4 = arith.constant 0 : index
    %8 = vector.load %arg8[%c0_3, %c0_4] : memref<16x256xf32, #tpu.memory_space<vmem>>, vector<16x256xf32>
    %cst = arith.constant dense<0.000000e+00> : vector<16x256xf32>
    %9 = tpu.matmul %6, %7, %cst {dimension_numbers = #tpu.dot_dimension_numbers<[1], [1], [0], [0], [0, 0, 1, 0], [], []>} : vector<16x512xbf16>, vector<256x512xbf16>, vector<16x256xf32> -> vector<16x256xf32>
    %10 = arith.addf %8, %9 : vector<16x256xf32>
    %c0_5 = arith.constant 0 : index
    %c0_6 = arith.constant 0 : index
    %11 = vector.load %arg8[%c0_5, %c0_6] : memref<16x256xf32, #tpu.memory_space<vmem>>, vector<16x256xf32>
    tpu.vector_store %arg8[%c0_5, %c0_6], %10 {strides = array<i32>} : memref<16x256xf32, #tpu.memory_space<vmem>>, vector<16x256xf32>,
    %c0_i32_7 = arith.constant 0 : i32
    %12 = arith.cmpi eq, %arg1, %c0_i32_7 : i32
    %13 = arith.extui %12 : i1 to i32
    %c0_i32_8 = arith.constant 0 : i32
    %14 = arith.cmpi ne, %13, %c0_i32_8 : i32
    scf.if %14 {
      %c0_9 = arith.constant 0 : index
      %c0_10 = arith.constant 0 : index
      %15 = vector.load %arg8[%c0_9, %c0_10] : memref<16x256xf32, #tpu.memory_space<vmem>>, vector<16x256xf32>
      %c0_11 = arith.constant 0 : index
      %c0_12 = arith.constant 0 : index
      %16 = vector.load %arg4[%c0_11, %c0_12] : memref<1x256xf32, #tpu.memory_space<vmem>>, vector<1x256xf32>
      %17 = vector.broadcast %16 : vector<1x256xf32> to vector<16x256xf32>
      %18 = arith.addf %15, %17 : vector<16x256xf32>
      %c0_13 = arith.constant 0 : index
      %19 = memref.load %arg5[%c0_13] : memref<1xf32, #tpu.memory_space<smem>>
      %cst_14 = arith.constant 0.000000e+00 : f32
      %20 = vector.broadcast %cst_14 : f32 to vector<16x256xf32>
      %21 = arith.cmpf oge, %18, %20 : vector<16x256xf32>
      %22 = vector.broadcast %19 : f32 to vector<16x256xf32>
      %23 = arith.mulf %22, %18 : vector<16x256xf32>
      %24 = arith.select %21, %18, %23 : vector<16x256xi1>, vector<16x256xf32>
      %cst_15 = arith.constant dense<0.000000e+00> : vector<256xf32>
      %25 = vector.multi_reduction <add>, %24, %cst_15 [0] : vector<16x256xf32> to vector<256xf32>
      %26 = vector.shape_cast %25 : vector<256xf32> to vector<1x256xf32>
      %cst_16 = arith.constant 1.600000e+01 : f32
      %27 = vector.broadcast %cst_16 : f32 to vector<1x256xf32>
      %28 = arith.divf %26, %27 : vector<1x256xf32>
      %29 = vector.broadcast %28 : vector<1x256xf32> to vector<16x256xf32>
      %30 = arith.subf %24, %29 : vector<16x256xf32>
      %31 = vector.broadcast %28 : vector<1x256xf32> to vector<16x256xf32>
      %32 = arith.subf %24, %31 : vector<16x256xf32>
      %33 = arith.mulf %30, %32 : vector<16x256xf32>
      %cst_17 = arith.constant dense<0.000000e+00> : vector<256xf32>
      %34 = vector.multi_reduction <add>, %33, %cst_17 [0] : vector<16x256xf32> to vector<256xf32>
      %35 = vector.shape_cast %34 : vector<256xf32> to vector<1x256xf32>
      %cst_18 = arith.constant 1.600000e+01 : f32
      %36 = vector.broadcast %cst_18 : f32 to vector<1x256xf32>
      %37 = arith.divf %35, %36 : vector<1x256xf32>
      %38 = vector.broadcast %28 : vector<1x256xf32> to vector<16x256xf32>
      %39 = arith.subf %24, %38 : vector<16x256xf32>
      %cst_19 = arith.constant 9.99999974E-6 : f32
      %40 = vector.broadcast %cst_19 : f32 to vector<1x256xf32>
      %41 = arith.addf %37, %40 : vector<1x256xf32>
      %42 = math.rsqrt %41 : vector<1x256xf32>
      %43 = vector.broadcast %42 : vector<1x256xf32> to vector<16x256xf32>
      %44 = arith.mulf %39, %43 : vector<16x256xf32>
      %c0_20 = arith.constant 0 : index
      %c0_21 = arith.constant 0 : index
      %45 = vector.load %arg6[%c0_20, %c0_21] : memref<1x256xf32, #tpu.memory_space<vmem>>, vector<1x256xf32>
      %46 = vector.broadcast %45 : vector<1x256xf32> to vector<16x256xf32>
      %47 = arith.mulf %44, %46 : vector<16x256xf32>
      %c0_22 = arith.constant 0 : index
      %c0_23 = arith.constant 0 : index
      %48 = vector.load %arg7[%c0_22, %c0_23] : memref<1x256xf32, #tpu.memory_space<vmem>>, vector<1x256xf32>
      %49 = vector.broadcast %48 : vector<1x256xf32> to vector<16x256xf32>
      %50 = arith.addf %47, %49 : vector<16x256xf32>
      %c0_24 = arith.constant 0 : index
      %c0_25 = arith.constant 0 : index
      %51 = vector.load %arg8[%c0_24, %c0_25] : memref<16x256xf32, #tpu.memory_space<vmem>>, vector<16x256xf32>
      tpu.vector_store %arg8[%c0_24, %c0_25], %50 {strides = array<i32>} : memref<16x256xf32, #tpu.memory_space<vmem>>, vector<16x256xf32>,
    } else {
    }
    return
  }
  func.func @transform_0(%arg0: i32, %arg1: i32) -> (i32, i32) {
    %c0_i32 = arith.constant 0 : i32
    %c0_i32_0 = arith.constant 0 : i32
    %c0_i32_1 = arith.constant 0 : i32
    return %c0_i32, %c0_i32_0 : i32, i32
  }
  func.func @transform_1(%arg0: i32, %arg1: i32) -> (i32, i32) {
    %c0_i32 = arith.constant 0 : i32
    return %arg0, %arg1 : i32, i32
  }
  func.func @transform_2(%arg0: i32, %arg1: i32) -> (i32, i32) {
    %c0_i32 = arith.constant 0 : i32
    %c0_i32_0 = arith.constant 0 : i32
    return %c0_i32, %arg0 : i32, i32
  }
  func.func @transform_3(%arg0: i32, %arg1: i32) -> i32 {
    %c0_i32 = arith.constant 0 : i32
    %c0_i32_0 = arith.constant 0 : i32
    return %c0_i32 : i32
  }
  func.func @transform_4(%arg0: i32, %arg1: i32) -> (i32, i32) {
    %c0_i32 = arith.constant 0 : i32
    %c0_i32_0 = arith.constant 0 : i32
    return %c0_i32, %arg0 : i32, i32
  }
  func.func @transform_5(%arg0: i32, %arg1: i32) -> (i32, i32) {
    %c0_i32 = arith.constant 0 : i32
    %c0_i32_0 = arith.constant 0 : i32
    return %c0_i32, %arg0 : i32, i32
  }
  func.func @transform_6(%arg0: i32, %arg1: i32) -> (i32, i32) {
    %c0_i32 = arith.constant 0 : i32
    %c0_i32_0 = arith.constant 0 : i32
    return %c0_i32, %arg0 : i32, i32
  }
}

</mosaic_0001>

<llo_original>
// kernel: tpu_custom_call.1
$region0: #{tpu_custom_call.1}
  #allocation0 [shape = 'u32[]', space=smem, size = 0x4, offset = 0x4, fixed_abs, tag = 'smem constant byte address 0x4 - core index']
  #allocation1 [shape = 'u32[144,128]{1,0:T(1,128)}', space=vmem, size = 0x12000, scoped, tag = 'internal scratch']
  #allocation2 [shape = 'f32[1]{0:T(128)S(6)}', space=smem, size = 0x200, scoped, tag = 'scoped memory for tpu_custom_call.1']
  %s0 = inlined_call_operand.hbm [shape: bf16[16,512], index: 0, kind: input, shape index: {}]
  %s1 = inlined_call_operand.hbm [shape: bf16[512,512], index: 1, kind: input, shape index: {}]
  %s2 = inlined_call_operand.vmem [shape: f32[1,512], index: 2, kind: input, shape index: {}]
  %s3 = inlined_call_operand.<no memory space> [shape: f32[1], index: 3, kind: input, shape index: {}]
  %s4 = inlined_call_operand.hbm [shape: f32[1,512], index: 4, kind: input, shape index: {}]
  %s5 = inlined_call_operand.vmem [shape: f32[1,512], index: 5, kind: input, shape index: {}]
  %s6 = inlined_call_operand.hbm [shape: f32[16,512], index: 6, kind: output, shape index: {}]
  %s7 = sld [smem:[#allocation0]]
  $region77: #{tpu_custom_call.1} parent=0
    _
  %s9 = ssub.s32 1, %s7
  %s10 = scalar_select 0, %s9, %s7
  %11 = sst [smem:[#allocation2]] %s3
  $region1: #{tpu_custom_call.1} parent=0
    #allocation3 [shape = 'u8[16384]{0}', space=vmem, size = 0x4000, scoped, tag = 'input window, operand 0, single buffered']
    #allocation4 [shape = 's32[2]{0}', space=sflag, size = 0x8, scoped, tag = 'scoped memory for tpu_custom_call.1']
    #allocation5 [shape = 's32[2]{0}', space=sflag, size = 0x8, scoped, tag = 'scoped memory for tpu_custom_call.1']
    #allocation6 [shape = 'u8[524288]{0}', space=vmem, size = 0x80000, scoped, tag = 'input window, operand 1']
    #allocation7 [shape = 's32[2]{0}', space=sflag, size = 0x8, scoped, tag = 'scoped memory for tpu_custom_call.1']
    #allocation8 [shape = 'u8[2048]{0}', space=vmem, size = 0x800, scoped, tag = 'input window, operand 4']
    #allocation9 [shape = 'u8[32768]{0}', space=vmem, size = 0x8000, scoped, tag = 'output window, operand 0']
    %12 = vsyncpa [#allocation4], 0
    %13 = vsyncpa [#allocation7], 0
    %s14 = scalar_lea.sflag [#allocation7], 1
    %15 = vsyncpa %s14, 0
    %16 = vsyncpa [#allocation5], 0
    %s17 = scalar_lea.sflag [#allocation5], 1
    %18 = vsyncpa %s17, 0
    loop: start=0, step=1, limit=4
    $region2: #{tpu_custom_call.1} parent=1 // loop_pre_header
      _
    $region3: #{tpu_custom_call.1} parent=1 // loop_header
      %s20 = sphi 0, %s24
      %p21 = scmp.ge.s32.totalorder %s20, 4
      %s27 = sphi 0, %s39
      %s28 = sphi 0, %s35
      %s29 = sphi 0, %s27
      %s30 = sphi 0, %s28
      %s31 = sphi 0, %s29
      %s32 = sphi 0, %s30
      %s40 = sphi 0, %s40
      %s42 = sphi 0, %s40
      %s43 = sphi 0, %s42
      %s57 = sphi 0, %s43
      %s65 = sphi 0, %s67
      %s68 = sphi 0, %s65
      %s69 = sphi 0, %s68
      %s85 = sphi 0, %s69
      %s91 = sphi 0, %s93
      %s94 = sphi 0, %s91
      %s95 = sphi 0, %s94
      %s111 = sphi 0, %s95
      %s115 = sphi 0, %s115
      %s117 = sphi 0, %s115
      %s118 = sphi 0, %s117
      %s132 = sphi 0, %s118
      %s138 = sphi 0, %s140
      %s141 = sphi 0, %s138
      %s142 = sphi 0, %s141
      %s158 = sphi 0, %s142
      %s164 = sphi 0, %s166
      %s167 = sphi 0, %s164
      %s168 = sphi 0, %s167
      %s184 = sphi 0, %s168
      %s190 = sphi 0, %s192
      %s193 = sphi 0, %s190
      %s194 = sphi 0, %s193
      %s210 = sphi 0, %s194
    $region4: #{tpu_custom_call.1} parent=1 // loop_header_branch
      %23 = sbr.rel (%p21) target = $region8
    $region5: #{tpu_custom_call.1} parent=1 // loop_body
      %s25 = ssub.s32 %s20, 1
      %s26 = ssub.s32 %s20, 2
      %s33 = sadd.s32 1, %s28
      %p34 = scmp.ge.s32.totalorder %s33, 1
      %s35 = scalar_select %p34, 0, %s33
      %s36 = sadd.s32 1, %s27
      %s37 = scalar_select %p34, %s36, %s27
      %p38 = scmp.ge.s32.totalorder %s37, 2
      %s39 = scalar_select %p38, 0, %s37
      %s41 = sadd.s32 %s40, 1
      %p44 = scmp.eq.s32.totalorder %s20, 1
      %p45 = scmp.ne.s32.totalorder %s40, %s42
      %p46 = scmp.eq.s32.totalorder %s20, 0
      %p47 = por %p45, %p46
      %p48 = scmp.ne.s32.totalorder %s40, %s42
      %p49 = scmp.eq.s32.totalorder %s25, 1
      %p50 = por %p48, %p49
      %p51 = scmp.ne.s32.totalorder %s42, %s43
      %p52 = scmp.eq.s32.totalorder %s25, 0
      %p53 = por %p51, %p52
      %p54 = scmp.ne.s32.totalorder %s42, %s43
      %p55 = scmp.eq.s32.totalorder %s26, 1
      %p56 = por %p54, %p55
      %p58 = scmp.ne.s32.totalorder %s43, %s57
      %p59 = scmp.eq.s32.totalorder %s26, 0
      %p60 = por %p58, %p59
      %s61 = ssub.s32 %s27, %s39
      %s62 = ssub.s32 %s28, %s35
      %s63 = sor.u32 %s61, %s62
      %p64 = scmp.eq.s32.totalorder %s63, 0
      %s66 = sadd.s32 %s65, 1
      %s67 = scalar_select %p64, %s65, %s66
      %p70 = pneg %p64
      %p71 = scmp.eq.s32.totalorder %s20, 1
      %p72 = por %p70, %p71
      %p73 = scmp.ne.s32.totalorder %s65, %s68
      %p74 = scmp.eq.s32.totalorder %s20, 0
      %p75 = por %p73, %p74
      %p76 = scmp.ne.s32.totalorder %s65, %s68
      %p77 = scmp.eq.s32.totalorder %s25, 1
      %p78 = por %p76, %p77
      %p79 = scmp.ne.s32.totalorder %s68, %s69
      %p80 = scmp.eq.s32.totalorder %s25, 0
      %p81 = por %p79, %p80
      %p82 = scmp.ne.s32.totalorder %s68, %s69
      %p83 = scmp.eq.s32.totalorder %s26, 1
      %p84 = por %p82, %p83
      %p86 = scmp.ne.s32.totalorder %s69, %s85
      %p87 = scmp.eq.s32.totalorder %s26, 0
      %p88 = por %p86, %p87
      %s89 = ssub.s32 %s27, %s39
      %p90 = scmp.eq.s32.totalorder %s89, 0
      %s92 = sadd.s32 %s91, 1
      %s93 = scalar_select %p90, %s91, %s92
      %p96 = pneg %p90
      %p97 = scmp.eq.s32.totalorder %s20, 1
      %p98 = por %p96, %p97
      %p99 = scmp.ne.s32.totalorder %s91, %s94
      %p100 = scmp.eq.s32.totalorder %s20, 0
      %p101 = por %p99, %p100
      %p102 = scmp.ne.s32.totalorder %s91, %s94
      %p103 = scmp.eq.s32.totalorder %s25, 1
      %p104 = por %p102, %p103
      %p105 = scmp.ne.s32.totalorder %s94, %s95
      %p106 = scmp.eq.s32.totalorder %s25, 0
      %p107 = por %p105, %p106
      %p108 = scmp.ne.s32.totalorder %s94, %s95
      %p109 = scmp.eq.s32.totalorder %s26, 1
      %p110 = por %p108, %p109
      %p112 = scmp.ne.s32.totalorder %s95, %s111
      %p113 = scmp.eq.s32.totalorder %s26, 0
      %p114 = por %p112, %p113
      %s116 = sadd.s32 %s115, 1
      %p119 = scmp.eq.s32.totalorder %s20, 1
      %p120 = scmp.ne.s32.totalorder %s115, %s117
      %p121 = scmp.eq.s32.totalorder %s20, 0
      %p122 = por %p120, %p121
      %p123 = scmp.ne.s32.totalorder %s115, %s117
      %p124 = scmp.eq.s32.totalorder %s25, 1
      %p125 = por %p123, %p124
      %p126 = scmp.ne.s32.totalorder %s117, %s118
      %p127 = scmp.eq.s32.totalorder %s25, 0
      %p128 = por %p126, %p127
      %p129 = scmp.ne.s32.totalorder %s117, %s118
      %p130 = scmp.eq.s32.totalorder %s26, 1
      %p131 = por %p129, %p130
      %p133 = scmp.ne.s32.totalorder %s118, %s132
      %p134 = scmp.eq.s32.totalorder %s26, 0
      %p135 = por %p133, %p134
      %s136 = ssub.s32 %s27, %s39
      %p137 = scmp.eq.s32.totalorder %s136, 0
      %s139 = sadd.s32 %s138, 1
      %s140 = scalar_select %p137, %s138, %s139
      %p143 = pneg %p137
      %p144 = scmp.eq.s32.totalorder %s20, 1
      %p145 = por %p143, %p144
      %p146 = scmp.ne.s32.totalorder %s138, %s141
      %p147 = scmp.eq.s32.totalorder %s20, 0
      %p148 = por %p146, %p147
      %p149 = scmp.ne.s32.totalorder %s138, %s141
      %p150 = scmp.eq.s32.totalorder %s25, 1
      %p151 = por %p149, %p150
      %p152 = scmp.ne.s32.totalorder %s141, %s142
      %p153 = scmp.eq.s32.totalorder %s25, 0
      %p154 = por %p152, %p153
      %p155 = scmp.ne.s32.totalorder %s141, %s142
      %p156 = scmp.eq.s32.totalorder %s26, 1
      %p157 = por %p155, %p156
      %p159 = scmp.ne.s32.totalorder %s142, %s158
      %p160 = scmp.eq.s32.totalorder %s26, 0
      %p161 = por %p159, %p160
      %s162 = ssub.s32 %s27, %s39
      %p163 = scmp.eq.s32.totalorder %s162, 0
      %s165 = sadd.s32 %s164, 1
      %s166 = scalar_select %p163, %s164, %s165
      %p169 = pneg %p163
      %p170 = scmp.eq.s32.totalorder %s20, 1
      %p171 = por %p169, %p170
      %p172 = scmp.ne.s32.totalorder %s164, %s167
      %p173 = scmp.eq.s32.totalorder %s20, 0
      %p174 = por %p172, %p173
      %p175 = scmp.ne.s32.totalorder %s164, %s167
      %p176 = scmp.eq.s32.totalorder %s25, 1
      %p177 = por %p175, %p176
      %p178 = scmp.ne.s32.totalorder %s167, %s168
      %p179 = scmp.eq.s32.totalorder %s25, 0
      %p180 = por %p178, %p179
      %p181 = scmp.ne.s32.totalorder %s167, %s168
      %p182 = scmp.eq.s32.totalorder %s26, 1
      %p183 = por %p181, %p182
      %p185 = scmp.ne.s32.totalorder %s168, %s184
      %p186 = scmp.eq.s32.totalorder %s26, 0
      %p187 = por %p185, %p186
      %s188 = ssub.s32 %s27, %s39
      %p189 = scmp.eq.s32.totalorder %s188, 0
      %s191 = sadd.s32 %s190, 1
      %s192 = scalar_select %p189, %s190, %s191
      %p195 = pneg %p189
      %p196 = scmp.eq.s32.totalorder %s20, 1
      %p197 = por %p195, %p196
      %p198 = scmp.ne.s32.totalorder %s190, %s193
      %p199 = scmp.eq.s32.totalorder %s20, 0
      %p200 = por %p198, %p199
      %p201 = scmp.ne.s32.totalorder %s190, %s193
      %p202 = scmp.eq.s32.totalorder %s25, 1
      %p203 = por %p201, %p202
      %p204 = scmp.ne.s32.totalorder %s193, %s194
      %p205 = scmp.eq.s32.totalorder %s25, 0
      %p206 = por %p204, %p205
      %p207 = scmp.ne.s32.totalorder %s193, %s194
      %p208 = scmp.eq.s32.totalorder %s26, 1
      %p209 = por %p207, %p208
      %p211 = scmp.ne.s32.totalorder %s194, %s210
      %p212 = scmp.eq.s32.totalorder %s26, 0
      %p213 = por %p211, %p212
      %p214 = scmp.le.s32.totalorder 1, %s20
      %p215 = scmp.lt.s32.totalorder %s20, 3
      %p216 = pnand %p214, %p215
      %p217 = pneg %p216
      // Predicated region
      $region9: #{tpu_custom_call.1} parent=5 // pred_check
        _
      $region10: #{tpu_custom_call.1} parent=5 // pred_check_branch
        %219 = sbr.rel (%p216) target = $region12
      $region11: #{tpu_custom_call.1} parent=5 // pred_region
        %s220 = ssub.s32 %s20, 1
        // Predicated region
        $region13: #{tpu_custom_call.1} parent=11 // pred_check
          %p221 = pneg %p53
        $region14: #{tpu_custom_call.1} parent=11 // pred_check_branch
          %223 = sbr.rel (%p221) target = $region16
        $region15: #{tpu_custom_call.1} parent=11 // pred_region
          %s225 = ssub.s32 512, 512
          %226 = vsyncadd [#allocation4], %s225
          %s227 = sshll.u32 [#allocation3], 4
          %s228 = int_to_ptr.vmem [resolvable:$true] %s227
          %233 = dma.hbm_to_vmem [thread:$0]  %s0, 512, %s228, [#allocation4], 256, 256, 16
        $region16: #{tpu_custom_call.1} parent=11 // pred_fallthru
          _
        // Predicated region
        $region17: #{tpu_custom_call.1} parent=11 // pred_check
          %p234 = pneg %p128
        $region18: #{tpu_custom_call.1} parent=11 // pred_check_branch
          %236 = sbr.rel (%p234) target = $region20
        $region19: #{tpu_custom_call.1} parent=11 // pred_region
          _
        $region20: #{tpu_custom_call.1} parent=11 // pred_fallthru
          _
      $region12: #{tpu_custom_call.1} parent=5 // pred_fallthru
        _
      %p237 = scmp.lt.s32.totalorder %s20, 2
      // Predicated region
      $region21: #{tpu_custom_call.1} parent=5 // pred_check
        %p238 = pneg %p237
      $region22: #{tpu_custom_call.1} parent=5 // pred_check_branch
        %240 = sbr.rel (%p238) target = $region24
      $region23: #{tpu_custom_call.1} parent=5 // pred_region
        // Predicated region
        $region25: #{tpu_custom_call.1} parent=23 // pred_check
          %p241 = pneg %p75
        $region26: #{tpu_custom_call.1} parent=23 // pred_check_branch
          %243 = sbr.rel (%p241) target = $region28
        $region27: #{tpu_custom_call.1} parent=23 // pred_region
          %s244 = sand.u32 %s20, 1
          %s245 = scalar_lea.sflag [#allocation7], %s244
          %s246 = sand.u32 %s65, 1
          %s247 = smul.addr %s246, 512
          %s248 = scalar_lea.vmem [#allocation6], %s247
          %s249 = smul.u32 32, %s27
          %s250 = smul.u32 4, %s28
          %s252 = ssub.s32 8192, 8192
          %253 = vsyncadd %s245, %s252
          %s254 = smul.addr %s249, 4
          %s255 = sadd.s32 %s250, %s254
          %s256 = smul.addr %s255, 64
          %s257 = scalar_lea.hbm %s1, %s256
          %s258 = sshll.u32 %s248, 4
          %s259 = int_to_ptr.vmem [resolvable:$true] %s258
          %264 = dma.hbm_to_vmem [thread:$0]  %s257, 8192, %s259, %s245, 256, 256, 16
        $region28: #{tpu_custom_call.1} parent=23 // pred_fallthru
          _
        // Predicated region
        $region29: #{tpu_custom_call.1} parent=23 // pred_check
          %p265 = pneg %p101
        $region30: #{tpu_custom_call.1} parent=23 // pred_check_branch
          %267 = sbr.rel (%p265) target = $region32
        $region31: #{tpu_custom_call.1} parent=23 // pred_region
          %s268 = smul.u32 2, %s27
          %p269 = scmp.lt.s32.totalorder %s268, 3
          %s270 = scalar_select %p269, %s268, 3
          %s271 = scalar_lea.vmem %s2, %s270
          %s272 = smul.u32 2, %s27
        $region32: #{tpu_custom_call.1} parent=23 // pred_fallthru
          _
        // Predicated region
        $region33: #{tpu_custom_call.1} parent=23 // pred_check
          %p273 = pneg %p148
        $region34: #{tpu_custom_call.1} parent=23 // pred_check_branch
          %275 = sbr.rel (%p273) target = $region36
        $region35: #{tpu_custom_call.1} parent=23 // pred_region
          %s276 = sand.u32 %s20, 1
          %s277 = scalar_lea.sflag [#allocation7], %s276
          %s278 = sand.u32 %s138, 1
          %s279 = smul.addr %s278, 2
          %s280 = scalar_lea.vmem [#allocation8], %s279
          %s281 = smul.u32 2, %s27
          %s283 = ssub.s32 32, 32
          %284 = vsyncadd %s277, %s283
          %s285 = smul.addr %s281, 16
          %s286 = scalar_lea.hbm %s4, %s285
          %s288 = sshll.u32 %s280, 4
          %s289 = int_to_ptr.vmem [resolvable:$true] %s288
          %291 = dma.hbm_to_vmem [thread:$0]  %s286, 32, %s289, %s277
        $region36: #{tpu_custom_call.1} parent=23 // pred_fallthru
          _
        // Predicated region
        $region37: #{tpu_custom_call.1} parent=23 // pred_check
          %p292 = pneg %p174
        $region38: #{tpu_custom_call.1} parent=23 // pred_check_branch
          %294 = sbr.rel (%p292) target = $region40
        $region39: #{tpu_custom_call.1} parent=23 // pred_region
          %s295 = smul.u32 2, %s27
          %p296 = scmp.lt.s32.totalorder %s295, 3
          %s297 = scalar_select %p296, %s295, 3
          %s298 = scalar_lea.vmem %s5, %s297
          %s299 = smul.u32 2, %s27
        $region40: #{tpu_custom_call.1} parent=23 // pred_fallthru
          _
      $region24: #{tpu_custom_call.1} parent=5 // pred_fallthru
        _
      %p300 = scmp.le.s32.totalorder 1, %s20
      %p301 = scmp.lt.s32.totalorder %s20, 3
      %p302 = pnand %p300, %p301
      %p303 = pneg %p302
      // Predicated region
      $region41: #{tpu_custom_call.1} parent=5 // pred_check
        _
      $region42: #{tpu_custom_call.1} parent=5 // pred_check_branch
        %305 = sbr.rel (%p302) target = $region44
      $region43: #{tpu_custom_call.1} parent=5 // pred_region
        %s306 = ssub.s32 %s20, 1
        // Predicated region
        $region45: #{tpu_custom_call.1} parent=43 // pred_check
          %p307 = pneg %p53
        $region46: #{tpu_custom_call.1} parent=43 // pred_check_branch
          %309 = sbr.rel (%p307) target = $region48
        $region47: #{tpu_custom_call.1} parent=43 // pred_region
          %310 = dma.done [#allocation4], 512
        $region48: #{tpu_custom_call.1} parent=43 // pred_fallthru
          _
        %s311 = sand.u32 %s25, 1
        %s312 = scalar_lea.sflag [#allocation7], %s311
        %s313 = sand.u32 %s68, 1
        %s314 = smul.addr %s313, 512
        %s315 = scalar_lea.vmem [#allocation6], %s314
        // Predicated region
        $region49: #{tpu_custom_call.1} parent=43 // pred_check
          %p316 = pneg %p81
        $region50: #{tpu_custom_call.1} parent=43 // pred_check_branch
          %318 = sbr.rel (%p316) target = $region52
        $region51: #{tpu_custom_call.1} parent=43 // pred_region
          %319 = dma.done %s312, 8192
        $region52: #{tpu_custom_call.1} parent=43 // pred_fallthru
          _
        %s320 = sand.u32 %s25, 1
        %s321 = scalar_lea.sflag [#allocation7], %s320
        %s322 = sand.u32 %s141, 1
        %s323 = smul.addr %s322, 2
        %s324 = scalar_lea.vmem [#allocation8], %s323
        // Predicated region
        $region53: #{tpu_custom_call.1} parent=43 // pred_check
          %p325 = pneg %p154
        $region54: #{tpu_custom_call.1} parent=43 // pred_check_branch
          %327 = sbr.rel (%p325) target = $region56
        $region55: #{tpu_custom_call.1} parent=43 // pred_region
          %328 = dma.done %s321, 32
        $region56: #{tpu_custom_call.1} parent=43 // pred_fallthru
          _
        %p329 = pneg %p53
        %p330 = pneg %p50
        %s331 = sand.u32 %s25, 1
        %s332 = scalar_lea.sflag [#allocation7], %s331
        %s333 = sand.u32 %s68, 1
        %s334 = smul.addr %s333, 512
        %s335 = scalar_lea.vmem [#allocation6], %s334
        %p336 = pneg %p81
        %p337 = pneg %p78
        %s338 = smul.u32 2, %s29
        %p339 = scmp.lt.s32.totalorder %s338, 3
        %s340 = scalar_select %p339, %s338, 3
        %s341 = scalar_lea.vmem %s2, %s340
        %p342 = pneg %p107
        %p343 = pneg %p104
        %p344 = pneg %p128
        %p345 = pneg %p125
        %s346 = sand.u32 %s25, 1
        %s347 = scalar_lea.sflag [#allocation7], %s346
        %s348 = sand.u32 %s141, 1
        %s349 = smul.addr %s348, 2
        %s350 = scalar_lea.vmem [#allocation8], %s349
        %p351 = pneg %p154
        %p352 = pneg %p151
        %s353 = smul.u32 2, %s29
        %p354 = scmp.lt.s32.totalorder %s353, 3
        %s355 = scalar_select %p354, %s353, 3
        %s356 = scalar_lea.vmem %s5, %s355
        %p357 = pneg %p180
        %p358 = pneg %p177
        %p359 = pneg %p206
        %p360 = pneg %p203
        %s361 = sand.u32 %s193, 1
        %s362 = scalar_lea.sflag [#allocation5], %s361
        %s363 = sand.u32 %s193, 1
        %s364 = smul.addr %s363, 32
        %s365 = scalar_lea.vmem [#allocation9], %s364
        %s366 = smul.u32 32, %s29
        %s367 = smul.u32 4, %s30
        %s368 = smul.u32 2, %s29
        %p369 = scmp.lt.s32.totalorder %s368, 3
        %s370 = scalar_select %p369, %s368, 3
        %s371 = scalar_lea.vmem %s2, %s370
        %s372 = smul.u32 2, %s29
        %s373 = smul.u32 2, %s29
        %s374 = smul.u32 2, %s29
        %p375 = scmp.lt.s32.totalorder %s374, 3
        %s376 = scalar_select %p375, %s374, 3
        %s377 = scalar_lea.vmem %s5, %s376
        %s378 = smul.u32 2, %s29
        %s379 = smul.u32 2, %s29
        %p380 = scmp.eq.s32.totalorder %s30, 0
        // Predicated region
        $region57: #{tpu_custom_call.1} parent=43 // pred_check
          %p381 = pneg %p380
        $region58: #{tpu_custom_call.1} parent=43 // pred_check_branch
          %383 = sbr.rel (%p381) target = $region60
        $region59: #{tpu_custom_call.1} parent=43 // pred_region
          %384 = vst [vmem:[%s365] sm:$0xff] 0.0
          %385 = vst [vmem:[%s365 + $0x8] sm:$0xff] 0.0
          %386 = vst [vmem:[%s365 + $0x10] sm:$0xff] 0.0
          %387 = vst [vmem:[%s365 + $0x18] sm:$0xff] 0.0
        $region60: #{tpu_custom_call.1} parent=43 // pred_fallthru
          _
        %s388 = smul.u32 %s30, 512
        %s389 = sshra.s32 %s388, 7
        %s390 = sand.u32 %s388, 127
        %s391 = smul.addr %s389, 4
        %s392 = scalar_lea.vmem [#allocation3], %s391
        %v393 = vld [vmem:[%s392] sm:$0xff]
        %v394 = vld [vmem:[%s392 + $0x8] sm:$0xff]
        %v395 = vld [vmem:[%s392 + $0x10] sm:$0xff]
        %v396 = vld [vmem:[%s392 + $0x18] sm:$0xff]
        %v397 = vld [vmem:[%s315] sm:$0xff]
        %v398 = vld [vmem:[%s315 + $0x8] sm:$0xff]
        %v399 = vld [vmem:[%s315 + $0x10] sm:$0xff]
        %v400 = vld [vmem:[%s315 + $0x18] sm:$0xff]
        %v401 = vld [vmem:[%s315 + $0x20] sm:$0xff]
        %v402 = vld [vmem:[%s315 + $0x28] sm:$0xff]
        %v403 = vld [vmem:[%s315 + $0x30] sm:$0xff]
        %v404 = vld [vmem:[%s315 + $0x38] sm:$0xff]
        %v405 = vld [vmem:[%s315 + $0x40] sm:$0xff]
        %v406 = vld [vmem:[%s315 + $0x48] sm:$0xff]
        %v407 = vld [vmem:[%s315 + $0x50] sm:$0xff]
        %v408 = vld [vmem:[%s315 + $0x58] sm:$0xff]
        %v409 = vld [vmem:[%s315 + $0x60] sm:$0xff]
        %v410 = vld [vmem:[%s315 + $0x68] sm:$0xff]
        %v411 = vld [vmem:[%s315 + $0x70] sm:$0xff]
        %v412 = vld [vmem:[%s315 + $0x78] sm:$0xff]
        %v413 = vld [vmem:[%s315 + $0x80] sm:$0xff]
        %v414 = vld [vmem:[%s315 + $0x88] sm:$0xff]
        %v415 = vld [vmem:[%s315 + $0x90] sm:$0xff]
        %v416 = vld [vmem:[%s315 + $0x98] sm:$0xff]
        %v417 = vld [vmem:[%s315 + $0xa0] sm:$0xff]
        %v418 = vld [vmem:[%s315 + $0xa8] sm:$0xff]
        %v419 = vld [vmem:[%s315 + $0xb0] sm:$0xff]
        %v420 = vld [vmem:[%s315 + $0xb8] sm:$0xff]
        %v421 = vld [vmem:[%s315 + $0xc0] sm:$0xff]
        %v422 = vld [vmem:[%s315 + $0xc8] sm:$0xff]
        %v423 = vld [vmem:[%s315 + $0xd0] sm:$0xff]
        %v424 = vld [vmem:[%s315 + $0xd8] sm:$0xff]
        %v425 = vld [vmem:[%s315 + $0xe0] sm:$0xff]
        %v426 = vld [vmem:[%s315 + $0xe8] sm:$0xff]
        %v427 = vld [vmem:[%s315 + $0xf0] sm:$0xff]
        %v428 = vld [vmem:[%s315 + $0xf8] sm:$0xff]
        %v429 = vld [vmem:[%s315 + $0x100] sm:$0xff]
        %v430 = vld [vmem:[%s315 + $0x108] sm:$0xff]
        %v431 = vld [vmem:[%s315 + $0x110] sm:$0xff]
        %v432 = vld [vmem:[%s315 + $0x118] sm:$0xff]
        %v433 = vld [vmem:[%s315 + $0x120] sm:$0xff]
        %v434 = vld [vmem:[%s315 + $0x128] sm:$0xff]
        %v435 = vld [vmem:[%s315 + $0x130] sm:$0xff]
        %v436 = vld [vmem:[%s315 + $0x138] sm:$0xff]
        %v437 = vld [vmem:[%s315 + $0x140] sm:$0xff]
        %v438 = vld [vmem:[%s315 + $0x148] sm:$0xff]
        %v439 = vld [vmem:[%s315 + $0x150] sm:$0xff]
        %v440 = vld [vmem:[%s315 + $0x158] sm:$0xff]
        %v441 = vld [vmem:[%s315 + $0x160] sm:$0xff]
        %v442 = vld [vmem:[%s315 + $0x168] sm:$0xff]
        %v443 = vld [vmem:[%s315 + $0x170] sm:$0xff]
        %v444 = vld [vmem:[%s315 + $0x178] sm:$0xff]
        %v445 = vld [vmem:[%s315 + $0x180] sm:$0xff]
        %v446 = vld [vmem:[%s315 + $0x188] sm:$0xff]
        %v447 = vld [vmem:[%s315 + $0x190] sm:$0xff]
        %v448 = vld [vmem:[%s315 + $0x198] sm:$0xff]
        %v449 = vld [vmem:[%s315 + $0x1a0] sm:$0xff]
        %v450 = vld [vmem:[%s315 + $0x1a8] sm:$0xff]
        %v451 = vld [vmem:[%s315 + $0x1b0] sm:$0xff]
        %v452 = vld [vmem:[%s315 + $0x1b8] sm:$0xff]
        %v453 = vld [vmem:[%s315 + $0x1c0] sm:$0xff]
        %v454 = vld [vmem:[%s315 + $0x1c8] sm:$0xff]
        %v455 = vld [vmem:[%s315 + $0x1d0] sm:$0xff]
        %v456 = vld [vmem:[%s315 + $0x1d8] sm:$0xff]
        %v457 = vld [vmem:[%s315 + $0x1e0] sm:$0xff]
        %v458 = vld [vmem:[%s315 + $0x1e8] sm:$0xff]
        %v459 = vld [vmem:[%s315 + $0x1f0] sm:$0xff]
        %v460 = vld [vmem:[%s315 + $0x1f8] sm:$0xff]
        %v461 = vld [vmem:[%s365] sm:$0xff]
        %v462 = vld [vmem:[%s365 + $0x8] sm:$0xff]
        %v463 = vld [vmem:[%s365 + $0x10] sm:$0xff]
        %v464 = vld [vmem:[%s365 + $0x18] sm:$0xff]
        %v469 = vunpack.c.l.b16 %v393
        %v470 = vunpack.c.h.b16 %v393
        %v471 = vunpack.c.l.b16 %v394
        %v472 = vunpack.c.h.b16 %v394
        %v473 = vunpack.c.l.b16 %v395
        %v474 = vunpack.c.h.b16 %v395
        %v475 = vunpack.c.l.b16 %v396
        %v476 = vunpack.c.h.b16 %v396
        %v477 = vpack.c.b16 %v473, %v469
        %v478 = vpack.c.b16 %v474, %v470
        %v479 = vpack.c.b16 %v475, %v471
        %v480 = vpack.c.b16 %v476, %v472
        %v549 = vunpack.c.l.b16 %v397
        %v550 = vunpack.c.h.b16 %v397
        %v551 = vunpack.c.l.b16 %v398
        %v552 = vunpack.c.h.b16 %v398
        %v553 = vunpack.c.l.b16 %v399
        %v554 = vunpack.c.h.b16 %v399
        %v555 = vunpack.c.l.b16 %v400
        %v556 = vunpack.c.h.b16 %v400
        %v557 = vunpack.c.l.b16 %v401
        %v558 = vunpack.c.h.b16 %v401
        %v559 = vunpack.c.l.b16 %v402
        %v560 = vunpack.c.h.b16 %v402
        %v561 = vunpack.c.l.b16 %v403
        %v562 = vunpack.c.h.b16 %v403
        %v563 = vunpack.c.l.b16 %v404
        %v564 = vunpack.c.h.b16 %v404
        %v565 = vunpack.c.l.b16 %v405
        %v566 = vunpack.c.h.b16 %v405
        %v567 = vunpack.c.l.b16 %v406
        %v568 = vunpack.c.h.b16 %v406
        %v569 = vunpack.c.l.b16 %v407
        %v570 = vunpack.c.h.b16 %v407
        %v571 = vunpack.c.l.b16 %v408
        %v572 = vunpack.c.h.b16 %v408
        %v573 = vunpack.c.l.b16 %v409
        %v574 = vunpack.c.h.b16 %v409
        %v575 = vunpack.c.l.b16 %v410
        %v576 = vunpack.c.h.b16 %v410
        %v577 = vunpack.c.l.b16 %v411
        %v578 = vunpack.c.h.b16 %v411
        %v579 = vunpack.c.l.b16 %v412
        %v580 = vunpack.c.h.b16 %v412
        %v581 = vunpack.c.l.b16 %v413
        %v582 = vunpack.c.h.b16 %v413
        %v583 = vunpack.c.l.b16 %v414
        %v584 = vunpack.c.h.b16 %v414
        %v585 = vunpack.c.l.b16 %v415
        %v586 = vunpack.c.h.b16 %v415
        %v587 = vunpack.c.l.b16 %v416
        %v588 = vunpack.c.h.b16 %v416
        %v589 = vunpack.c.l.b16 %v417
        %v590 = vunpack.c.h.b16 %v417
        %v591 = vunpack.c.l.b16 %v418
        %v592 = vunpack.c.h.b16 %v418
        %v593 = vunpack.c.l.b16 %v419
        %v594 = vunpack.c.h.b16 %v419
        %v595 = vunpack.c.l.b16 %v420
        %v596 = vunpack.c.h.b16 %v420
        %v597 = vunpack.c.l.b16 %v421
        %v598 = vunpack.c.h.b16 %v421
        %v599 = vunpack.c.l.b16 %v422
        %v600 = vunpack.c.h.b16 %v422
        %v601 = vunpack.c.l.b16 %v423
        %v602 = vunpack.c.h.b16 %v423
        %v603 = vunpack.c.l.b16 %v424
        %v604 = vunpack.c.h.b16 %v424
        %v605 = vunpack.c.l.b16 %v425
        %v606 = vunpack.c.h.b16 %v425
        %v607 = vunpack.c.l.b16 %v426
        %v608 = vunpack.c.h.b16 %v426
        %v609 = vunpack.c.l.b16 %v427
        %v610 = vunpack.c.h.b16 %v427
        %v611 = vunpack.c.l.b16 %v428
        %v612 = vunpack.c.h.b16 %v428
        %v613 = vunpack.c.l.b16 %v429
        %v614 = vunpack.c.h.b16 %v429
        %v615 = vunpack.c.l.b16 %v430
        %v616 = vunpack.c.h.b16 %v430
        %v617 = vunpack.c.l.b16 %v431
        %v618 = vunpack.c.h.b16 %v431
        %v619 = vunpack.c.l.b16 %v432
        %v620 = vunpack.c.h.b16 %v432
        %v621 = vunpack.c.l.b16 %v433
        %v622 = vunpack.c.h.b16 %v433
        %v623 = vunpack.c.l.b16 %v434
        %v624 = vunpack.c.h.b16 %v434
        %v625 = vunpack.c.l.b16 %v435
        %v626 = vunpack.c.h.b16 %v435
        %v627 = vunpack.c.l.b16 %v436
        %v628 = vunpack.c.h.b16 %v436
        %v629 = vunpack.c.l.b16 %v437
        %v630 = vunpack.c.h.b16 %v437
        %v631 = vunpack.c.l.b16 %v438
        %v632 = vunpack.c.h.b16 %v438
        %v633 = vunpack.c.l.b16 %v439
        %v634 = vunpack.c.h.b16 %v439
        %v635 = vunpack.c.l.b16 %v440
        %v636 = vunpack.c.h.b16 %v440
        %v637 = vunpack.c.l.b16 %v441
        %v638 = vunpack.c.h.b16 %v441
        %v639 = vunpack.c.l.b16 %v442
        %v640 = vunpack.c.h.b16 %v442
        %v641 = vunpack.c.l.b16 %v443
        %v642 = vunpack.c.h.b16 %v443
        %v643 = vunpack.c.l.b16 %v444
        %v644 = vunpack.c.h.b16 %v444
        %v645 = vunpack.c.l.b16 %v445
        %v646 = vunpack.c.h.b16 %v445
        %v647 = vunpack.c.l.b16 %v446
        %v648 = vunpack.c.h.b16 %v446
        %v649 = vunpack.c.l.b16 %v447
        %v650 = vunpack.c.h.b16 %v447
        %v651 = vunpack.c.l.b16 %v448
        %v652 = vunpack.c.h.b16 %v448
        %v653 = vunpack.c.l.b16 %v449
        %v654 = vunpack.c.h.b16 %v449
        %v655 = vunpack.c.l.b16 %v450
        %v656 = vunpack.c.h.b16 %v450
        %v657 = vunpack.c.l.b16 %v451
        %v658 = vunpack.c.h.b16 %v451
        %v659 = vunpack.c.l.b16 %v452
        %v660 = vunpack.c.h.b16 %v452
        %v661 = vunpack.c.l.b16 %v453
        %v662 = vunpack.c.h.b16 %v453
        %v663 = vunpack.c.l.b16 %v454
        %v664 = vunpack.c.h.b16 %v454
        %v665 = vunpack.c.l.b16 %v455
        %v666 = vunpack.c.h.b16 %v455
        %v667 = vunpack.c.l.b16 %v456
        %v668 = vunpack.c.h.b16 %v456
        %v669 = vunpack.c.l.b16 %v457
        %v670 = vunpack.c.h.b16 %v457
        %v671 = vunpack.c.l.b16 %v458
        %v672 = vunpack.c.h.b16 %v458
        %v673 = vunpack.c.l.b16 %v459
        %v674 = vunpack.c.h.b16 %v459
        %v675 = vunpack.c.l.b16 %v460
        %v676 = vunpack.c.h.b16 %v460
        %v677 = vpack.c.b16 %v553, %v549
        %v678 = vpack.c.b16 %v554, %v550
        %v679 = vpack.c.b16 %v555, %v551
        %v680 = vpack.c.b16 %v556, %v552
        %v681 = vpack.c.b16 %v561, %v557
        %v682 = vpack.c.b16 %v562, %v558
        %v683 = vpack.c.b16 %v563, %v559
        %v684 = vpack.c.b16 %v564, %v560
        %v685 = vpack.c.b16 %v569, %v565
        %v686 = vpack.c.b16 %v570, %v566
        %v687 = vpack.c.b16 %v571, %v567
        %v688 = vpack.c.b16 %v572, %v568
        %v689 = vpack.c.b16 %v577, %v573
        %v690 = vpack.c.b16 %v578, %v574
        %v691 = vpack.c.b16 %v579, %v575
        %v692 = vpack.c.b16 %v580, %v576
        %v693 = vpack.c.b16 %v585, %v581
        %v694 = vpack.c.b16 %v586, %v582
        %v695 = vpack.c.b16 %v587, %v583
        %v696 = vpack.c.b16 %v588, %v584
        %v697 = vpack.c.b16 %v593, %v589
        %v698 = vpack.c.b16 %v594, %v590
        %v699 = vpack.c.b16 %v595, %v591
        %v700 = vpack.c.b16 %v596, %v592
        %v701 = vpack.c.b16 %v601, %v597
        %v702 = vpack.c.b16 %v602, %v598
        %v703 = vpack.c.b16 %v603, %v599
        %v704 = vpack.c.b16 %v604, %v600
        %v705 = vpack.c.b16 %v609, %v605
        %v706 = vpack.c.b16 %v610, %v606
        %v707 = vpack.c.b16 %v611, %v607
        %v708 = vpack.c.b16 %v612, %v608
        %v709 = vpack.c.b16 %v617, %v613
        %v710 = vpack.c.b16 %v618, %v614
        %v711 = vpack.c.b16 %v619, %v615
        %v712 = vpack.c.b16 %v620, %v616
        %v713 = vpack.c.b16 %v625, %v621
        %v714 = vpack.c.b16 %v626, %v622
        %v715 = vpack.c.b16 %v627, %v623
        %v716 = vpack.c.b16 %v628, %v624
        %v717 = vpack.c.b16 %v633, %v629
        %v718 = vpack.c.b16 %v634, %v630
        %v719 = vpack.c.b16 %v635, %v631
        %v720 = vpack.c.b16 %v636, %v632
        %v721 = vpack.c.b16 %v641, %v637
        %v722 = vpack.c.b16 %v642, %v638
        %v723 = vpack.c.b16 %v643, %v639
        %v724 = vpack.c.b16 %v644, %v640
        %v725 = vpack.c.b16 %v649, %v645
        %v726 = vpack.c.b16 %v650, %v646
        %v727 = vpack.c.b16 %v651, %v647
        %v728 = vpack.c.b16 %v652, %v648
        %v729 = vpack.c.b16 %v657, %v653
        %v730 = vpack.c.b16 %v658, %v654
        %v731 = vpack.c.b16 %v659, %v655
        %v732 = vpack.c.b16 %v660, %v656
        %v733 = vpack.c.b16 %v665, %v661
        %v734 = vpack.c.b16 %v666, %v662
        %v735 = vpack.c.b16 %v667, %v663
        %v736 = vpack.c.b16 %v668, %v664
        %v737 = vpack.c.b16 %v673, %v669
        %v738 = vpack.c.b16 %v674, %v670
        %v739 = vpack.c.b16 %v675, %v671
        %v740 = vpack.c.b16 %v676, %v672
        %805 = vmatprep.subr.bf16.mxu0 %v706
        %806 = vmatpush1.bf16.xpose.msra.mxu0 %v705
        %807 = vmatprep.subr.bf16.mxu0 %v702
        %808 = vmatpush1.bf16.xpose.msra.mxu0 %v701
        %809 = vmatprep.subr.bf16.mxu0 %v698
        %810 = vmatpush1.bf16.xpose.msra.mxu0 %v697
        %811 = vmatprep.subr.bf16.mxu0 %v694
        %812 = vmatpush1.bf16.xpose.msra.mxu0 %v693
        %813 = vmatprep.subr.bf16.mxu0 %v690
        %814 = vmatpush1.bf16.xpose.msra.mxu0 %v689
        %815 = vmatprep.subr.bf16.mxu0 %v686
        %816 = vmatpush1.bf16.xpose.msra.mxu0 %v685
        %817 = vmatprep.subr.bf16.mxu0 %v682
        %818 = vmatpush1.bf16.xpose.msra.mxu0 %v681
        %819 = vmatprep.subr.bf16.mxu0 %v678
        %820 = vmatpush1.bf16.xpose.msra.mxu0 %v677
        %821 = vmatprep.subr.bf16.mxu0 %v738
        %822 = vmatpush2.bf16.xpose.msra.mxu0 %v737
        %823 = vmatprep.subr.bf16.mxu0 %v734
        %824 = vmatpush2.bf16.xpose.msra.mxu0 %v733
        %825 = vmatprep.subr.bf16.mxu0 %v730
        %826 = vmatpush2.bf16.xpose.msra.mxu0 %v729
        %827 = vmatprep.subr.bf16.mxu0 %v726
        %828 = vmatpush2.bf16.xpose.msra.mxu0 %v725
        %829 = vmatprep.subr.bf16.mxu0 %v722
        %830 = vmatpush2.bf16.xpose.msra.mxu0 %v721
        %831 = vmatprep.subr.bf16.mxu0 %v718
        %832 = vmatpush2.bf16.xpose.msra.mxu0 %v717
        %833 = vmatprep.subr.bf16.mxu0 %v714
        %834 = vmatpush2.bf16.xpose.msra.mxu0 %v713
        %835 = vmatprep.subr.bf16.mxu0 %v710
        %836 = vmatpush2.bf16.xpose.msra.mxu0 %v709
        %837 = vmatprep.mubr.bf16.mxu0 %v478
        %838 = vmatmul.mubr.bf16.gmra.mxu0 %v477
        %v839 = vpop.f32.mrf.mxu0
        %v840 = vadd.f32 0.0, %v839
        %v841 = vpop.f32.mrf.mxu0
        %v842 = vadd.f32 0.0, %v841
        %v843 = vpop.f32.mrf.mxu0
        %v844 = vadd.f32 0.0, %v843
        %v845 = vpop.f32.mrf.mxu0
        %v846 = vadd.f32 0.0, %v845
        %847 = vdwg.mxu0
        %848 = vmatprep.subr.bf16.mxu0 %v708
        %849 = vmatpush1.bf16.xpose.msra.mxu0 %v707
        %850 = vmatprep.subr.bf16.mxu0 %v704
        %851 = vmatpush1.bf16.xpose.msra.mxu0 %v703
        %852 = vmatprep.subr.bf16.mxu0 %v700
        %853 = vmatpush1.bf16.xpose.msra.mxu0 %v699
        %854 = vmatprep.subr.bf16.mxu0 %v696
        %855 = vmatpush1.bf16.xpose.msra.mxu0 %v695
        %856 = vmatprep.subr.bf16.mxu0 %v692
        %857 = vmatpush1.bf16.xpose.msra.mxu0 %v691
        %858 = vmatprep.subr.bf16.mxu0 %v688
        %859 = vmatpush1.bf16.xpose.msra.mxu0 %v687
        %860 = vmatprep.subr.bf16.mxu0 %v684
        %861 = vmatpush1.bf16.xpose.msra.mxu0 %v683
        %862 = vmatprep.subr.bf16.mxu0 %v680
        %863 = vmatpush1.bf16.xpose.msra.mxu0 %v679
        %864 = vmatprep.subr.bf16.mxu0 %v740
        %865 = vmatpush2.bf16.xpose.msra.mxu0 %v739
        %866 = vmatprep.subr.bf16.mxu0 %v736
        %867 = vmatpush2.bf16.xpose.msra.mxu0 %v735
        %868 = vmatprep.subr.bf16.mxu0 %v732
        %869 = vmatpush2.bf16.xpose.msra.mxu0 %v731
        %870 = vmatprep.subr.bf16.mxu0 %v728
        %871 = vmatpush2.bf16.xpose.msra.mxu0 %v727
        %872 = vmatprep.subr.bf16.mxu0 %v724
        %873 = vmatpush2.bf16.xpose.msra.mxu0 %v723
        %874 = vmatprep.subr.bf16.mxu0 %v720
        %875 = vmatpush2.bf16.xpose.msra.mxu0 %v719
        %876 = vmatprep.subr.bf16.mxu0 %v716
        %877 = vmatpush2.bf16.xpose.msra.mxu0 %v715
        %878 = vmatprep.subr.bf16.mxu0 %v712
        %879 = vmatpush2.bf16.xpose.msra.mxu0 %v711
        %880 = vmatprep.mubr.bf16.mxu0 %v480
        %881 = vmatmul.mubr.bf16.gmra.mxu0 %v479
        %v882 = vpop.f32.mrf.mxu0
        %v883 = vadd.f32 %v840, %v882
        %v884 = vpop.f32.mrf.mxu0
        %v885 = vadd.f32 %v842, %v884
        %v886 = vpop.f32.mrf.mxu0
        %v887 = vadd.f32 %v844, %v886
        %v888 = vpop.f32.mrf.mxu0
        %v889 = vadd.f32 %v846, %v888
        %890 = vdwg.mxu0
        %v891 = vadd.f32 %v461, %v883
        %v892 = vadd.f32 %v462, %v885
        %v893 = vadd.f32 %v463, %v887
        %v894 = vadd.f32 %v464, %v889
        %895 = vst [vmem:[%s365] sm:$0xff] %v891
        %896 = vst [vmem:[%s365 + $0x8] sm:$0xff] %v892
        %897 = vst [vmem:[%s365 + $0x10] sm:$0xff] %v893
        %898 = vst [vmem:[%s365 + $0x18] sm:$0xff] %v894
        // Predicated region
        $region61: #{tpu_custom_call.1} parent=43 // pred_check
          %p899 = pneg %p380
        $region62: #{tpu_custom_call.1} parent=43 // pred_check_branch
          %901 = sbr.rel (%p899) target = $region64
        $region63: #{tpu_custom_call.1} parent=43 // pred_region
          %v902 = vld [vmem:[%s365] sm:$0xff]
          %v903 = vld [vmem:[%s365 + $0x8] sm:$0xff]
          %v904 = vld [vmem:[%s365 + $0x10] sm:$0xff]
          %v905 = vld [vmem:[%s365 + $0x18] sm:$0xff]
          %v906 = vld [vmem:[%s371] sm:$0x3]
          %v908 = vlaneseq
          %v909 = vshrl.u32 %v908, 7
          %v910 = vsub.s32 0, %v909
          %v911 = vrot.slane %v906, %v910
          %v912 = vlaneseq
          %v913 = vshrl.u32 %v912, 7
          %v914 = vsub.s32 1, %v913
          %v915 = vrot.slane %v906, %v914
          %v918 = vadd.f32 %v902, %v911
          %v919 = vadd.f32 %v903, %v915
          %v920 = vadd.f32 %v904, %v911
          %v921 = vadd.f32 %v905, %v915
          %s922 = sld [smem:[#allocation2]]
          %vm923 = vcmp.ge.f32.partialorder %v918, 0.0
          %vm924 = vcmp.ge.f32.partialorder %v919, 0.0
          %vm925 = vcmp.ge.f32.partialorder %v920, 0.0
          %vm926 = vcmp.ge.f32.partialorder %v921, 0.0
          %v927 = vstv %s922
          %v928 = vmul.f32 %v927, %v918
          %v929 = vmul.f32 %v927, %v919
          %v930 = vmul.f32 %v927, %v920
          %v931 = vmul.f32 %v927, %v921
          %v932 = vsel %vm923, %v918, %v928
          %v933 = vsel %vm924, %v919, %v929
          %v934 = vsel %vm925, %v920, %v930
          %v935 = vsel %vm926, %v921, %v931
          %v936 = vadd.f32 %v932, %v934
          %v937 = vrot.slane %v936, 4
          %v938 = vadd.f32 %v936, %v937
          %v939 = vrot.slane %v938, 2
          %v940 = vadd.f32 %v938, %v939
          %v941 = vrot.slane %v940, 1
          %v942 = vadd.f32 %v940, %v941
          %v943 = vadd.f32 %v933, %v935
          %v944 = vrot.slane %v943, 4
          %v945 = vadd.f32 %v943, %v944
          %v946 = vrot.slane %v945, 2
          %v947 = vadd.f32 %v945, %v946
          %v948 = vrot.slane %v947, 1
          %v949 = vadd.f32 %v947, %v948
          %v950 = vrcp.pop 16.0
          %v951 = vmul.f32 %v942, %v950
          %v952 = vmul.f32 %v949, %v950
          %v953 = vsub.f32 %v932, %v951
          %v954 = vsub.f32 %v933, %v952
          %v955 = vsub.f32 %v934, %v951
          %v956 = vsub.f32 %v935, %v952
          %v957 = vmul.f32 %v953, %v953
          %v958 = vmul.f32 %v954, %v954
          %v959 = vmul.f32 %v955, %v955
          %v960 = vmul.f32 %v956, %v956
          %v961 = vadd.f32 %v957, %v959
          %v962 = vrot.slane %v961, 4
          %v963 = vadd.f32 %v961, %v962
          %v964 = vrot.slane %v963, 2
          %v965 = vadd.f32 %v963, %v964
          %v966 = vrot.slane %v965, 1
          %v967 = vadd.f32 %v965, %v966
          %v968 = vadd.f32 %v958, %v960
          %v969 = vrot.slane %v968, 4
          %v970 = vadd.f32 %v968, %v969
          %v971 = vrot.slane %v970, 2
          %v972 = vadd.f32 %v970, %v971
          %v973 = vrot.slane %v972, 1
          %v974 = vadd.f32 %v972, %v973
          %v975 = vmul.f32 %v967, %v950
          %v976 = vmul.f32 %v974, %v950
          %v977 = vadd.f32 %v975, 1e-05
          %v978 = vadd.f32 %v976, 1e-05
          %v979 = vrsqrt.pop %v977
          %v980 = vrsqrt.pop %v978
          %v981 = vmul.f32 %v953, %v979
          %v982 = vmul.f32 %v954, %v980
          %v983 = vmul.f32 %v955, %v979
          %v984 = vmul.f32 %v956, %v980
          %v985 = vld [vmem:[%s324] sm:$0x3]
          %v987 = vlaneseq
          %v988 = vshrl.u32 %v987, 7
          %v989 = vsub.s32 0, %v988
          %v990 = vrot.slane %v985, %v989
          %v991 = vlaneseq
          %v992 = vshrl.u32 %v991, 7
          %v993 = vsub.s32 1, %v992
          %v994 = vrot.slane %v985, %v993
          %v997 = vmul.f32 %v981, %v990
          %v998 = vmul.f32 %v982, %v994
          %v999 = vmul.f32 %v983, %v990
          %v1000 = vmul.f32 %v984, %v994
          %v1001 = vld [vmem:[%s377] sm:$0x3]
          %v1003 = vlaneseq
          %v1004 = vshrl.u32 %v1003, 7
          %v1005 = vsub.s32 0, %v1004
          %v1006 = vrot.slane %v1001, %v1005
          %v1007 = vlaneseq
          %v1008 = vshrl.u32 %v1007, 7
          %v1009 = vsub.s32 1, %v1008
          %v1010 = vrot.slane %v1001, %v1009
          %v1013 = vadd.f32 %v997, %v1006
          %v1014 = vadd.f32 %v998, %v1010
          %v1015 = vadd.f32 %v999, %v1006
          %v1016 = vadd.f32 %v1000, %v1010
          %1017 = vst [vmem:[%s365] sm:$0xff] %v1013
          %1018 = vst [vmem:[%s365 + $0x8] sm:$0xff] %v1014
          %1019 = vst [vmem:[%s365 + $0x10] sm:$0xff] %v1015
          %1020 = vst [vmem:[%s365 + $0x18] sm:$0xff] %v1016
        $region64: #{tpu_custom_call.1} parent=43 // pred_fallthru
          _
        %s1021 = sand.u32 %s193, 1
        %s1022 = scalar_lea.sflag [#allocation5], %s1021
        %s1023 = sand.u32 %s193, 1
        %s1024 = smul.addr %s1023, 32
        %s1025 = scalar_lea.vmem [#allocation9], %s1024
        // Predicated region
        $region65: #{tpu_custom_call.1} parent=43 // pred_check
          %p1026 = pneg %p203
        $region66: #{tpu_custom_call.1} parent=43 // pred_check_branch
          %1028 = sbr.rel (%p1026) target = $region68
        $region67: #{tpu_custom_call.1} parent=43 // pred_region
          %s1029 = smul.u32 2, %s29
          %s1031 = ssub.s32 512, 512
          %1032 = vsyncadd %s1022, %s1031
          %s1033 = smul.addr %s1029, 128
          %s1034 = scalar_lea.hbm %s6, %s1033
          %s1035 = sshll.u32 %s1025, 4
          %s1036 = int_to_ptr.vmem [resolvable:$true] %s1035
          %1041 = dma.vmem_to_hbm [thread:$0]  %s1036, 512, %s1034, %s1022, 256, 512, 16
        $region68: #{tpu_custom_call.1} parent=43 // pred_fallthru
          _
      $region44: #{tpu_custom_call.1} parent=5 // pred_fallthru
        _
      %p1042 = scmp.le.s32.totalorder 2, %s20
      // Predicated region
      $region69: #{tpu_custom_call.1} parent=5 // pred_check
        %p1043 = pneg %p1042
      $region70: #{tpu_custom_call.1} parent=5 // pred_check_branch
        %1045 = sbr.rel (%p1043) target = $region72
      $region71: #{tpu_custom_call.1} parent=5 // pred_region
        %s1046 = ssub.s32 %s20, 2
        // Predicated region
        $region73: #{tpu_custom_call.1} parent=71 // pred_check
          %p1047 = pneg %p209
        $region74: #{tpu_custom_call.1} parent=71 // pred_check_branch
          %1049 = sbr.rel (%p1047) target = $region76
        $region75: #{tpu_custom_call.1} parent=71 // pred_region
          %s1050 = sand.u32 %s194, 1
          %s1051 = scalar_lea.sflag [#allocation5], %s1050
          %s1052 = sand.u32 %s194, 1
          %s1053 = smul.addr %s1052, 32
          %s1054 = scalar_lea.vmem [#allocation9], %s1053
          %1055 = dma.done %s1051, 512
        $region76: #{tpu_custom_call.1} parent=71 // pred_fallthru
          _
      $region72: #{tpu_custom_call.1} parent=5 // pred_fallthru
        _
    $region6: #{tpu_custom_call.1} parent=1 // loop_footer
      %s24 = sadd.s32 1, %s20
    $region7: #{tpu_custom_call.1} parent=1 // loop_footer_branch
      %19 = sbr.rel target = $region3
    $region8: #{tpu_custom_call.1} parent=1 // loop_exit
      _
    %1056 = vsyncpa [#allocation4], 1
    %s1057 = scalar_lea.sflag [#allocation4], 1
    %1058 = vsyncpa %s1057, 1
    %1059 = vsyncpa [#allocation7], 1
    %s1060 = scalar_lea.sflag [#allocation7], 1
    %1061 = vsyncpa %s1060, 1
    %1062 = vsyncpa [#allocation5], 1
    %s1063 = scalar_lea.sflag [#allocation5], 1
    %1064 = vsyncpa %s1063, 1

</llo_original>
